<compile_context>
chip_gen: v5e
topology: v5e:2x2
jax: 0.10.0
libtpu: 0.0.40
codegen_flags: <defaults>
</compile_context>

<pallas_src>
import math

import jax
import jax.numpy as jnp
from jax.experimental import pallas as pl
from jax.experimental.pallas import tpu as pltpu

LOG_SQRT_2PI = math.log(math.sqrt(2.0 * math.pi))


def _round_up(a: int, m: int) -> int:
    return -(-a // m) * m


def _choose_tile_n(dim: int, kk_pad: int, x_bytes: int,
                   budget_bytes: int = 40 * 1024 * 1024,
                   tile_cap: int = 4096) -> int:
    """Largest N-tile s.t. double-buffered (x tile + out tile) + mk^T + bias fit."""
    per_row = 2 * (dim * x_bytes + kk_pad * 4)          # double buffered
    fixed = 2 * (dim * kk_pad * 4 + kk_pad * 4)         # mk^T + bias (double buffered)
    tile = max(8, (budget_bytes - fixed) // max(per_row, 1))
    tile = min(tile_cap, tile)
    if tile >= 256:
        tile = (tile // 256) * 256                      # MXU-friendly M
    else:
        tile = _round_up(tile, 8)
    return int(tile)


def gmm_kernel(x_ref, mkt_ref, bias_ref, o_ref):
    # x_ref:    (tile_n, dim)      block of samples (native dtype)
    # mkt_ref:  (dim, kk_pad)      transposed component means, f32, replicated
    # bias_ref: (1, kk_pad)        -0.5*||m_k||^2 - dim*log(sqrt(2*pi))
    # o_ref:    (tile_n, kk_pad)   exp of per-component log-likelihood
    x = x_ref[...].astype(jnp.float32)                                  # (tn, d)
    xm = jnp.dot(x, mkt_ref[...], preferred_element_type=jnp.float32)   # MXU
    x2 = jnp.sum(x * x, axis=-1, keepdims=True)                         # (tn, 1)
    log_p = xm - 0.5 * x2 + bias_ref[...]
    o_ref[...] = jnp.exp(log_p).astype(o_ref.dtype)                     # EUP exp


def gmm_forward(x, mk, *, tile_n=None):
    """x: any shape with trailing size divisible by dim; mk: (kk, dim)."""
    mk = jnp.asarray(mk, jnp.float32)
    kk, dim = mk.shape
    x2d = x.reshape(-1, dim)                  # keep native dtype (no HBM cast pass)
    n = x2d.shape[0]

    # Lane-dense output width.
    kk_pad = _round_up(kk, 128)

    # Tile size: as large as the VMEM budget allows (double buffered), but never
    # larger than the (sublane-rounded) problem itself.
    x_bytes = jnp.dtype(x2d.dtype).itemsize
    if tile_n is None:
        tile_n = _choose_tile_n(dim, kk_pad, x_bytes)
    tile_n = max(8, min(int(tile_n), _round_up(n, 8)))
    tile_n = (tile_n // 256) * 256 if tile_n >= 256 else _round_up(tile_n, 8)

    # Pad N so the grid is even (2-TC sharding on v7x) and exact.
    n_pad = _round_up(n, 2 * tile_n)
    grid = n_pad // tile_n

    if n_pad != n:
        x2d = jnp.pad(x2d, ((0, n_pad - n), (0, 0)))

    # Precompute transposed means and per-component bias (grid-invariant).
    mk_t = mk.T                                                  # (dim, kk)
    bias = -0.5 * jnp.sum(mk * mk, axis=1) - dim * LOG_SQRT_2PI  # (kk,)
    if kk_pad != kk:
        mk_t = jnp.pad(mk_t, ((0, 0), (0, kk_pad - kk)))
        bias = jnp.pad(bias, ((0, kk_pad - kk),), constant_values=-1e30)
    bias = bias.reshape(1, kk_pad).astype(jnp.float32)

    out_pad = pl.pallas_call(
        gmm_kernel,
        out_shape=jax.ShapeDtypeStruct((n_pad, kk_pad), jnp.float32),
        grid=(grid,),
        in_specs=[
            pl.BlockSpec((tile_n, dim), lambda i: (i, 0)),
            pl.BlockSpec((dim, kk_pad), lambda i: (0, 0)),
            pl.BlockSpec((1, kk_pad), lambda i: (0, 0)),
        ],
        out_specs=pl.BlockSpec((tile_n, kk_pad), lambda i: (i, 0)),
        compiler_params=pltpu.CompilerParams(
            dimension_semantics=("parallel",),
            vmem_limit_bytes=48 * 1024 * 1024,   # safe on v7x's 64 MiB physical VMEM
        ),
    )(x2d, mk_t, bias)

    # Drop padded rows / dummy components.
    return out_pad[:n, :kk]


def gmm_forward_ref(x, mk):
    dim = mk.shape[1]
    x2d = x.reshape(-1, 1, dim).astype(jnp.float32)
    out = (x2d - mk[None, :, :]) ** 2 * -0.5 - LOG_SQRT_2PI
    return jnp.exp(out.sum(axis=2))


if __name__ == "__main__":
    # Module hyperparameters (synthetic, deterministic init)
    kk, dim, n_total = 8, 4, 100
    std = [1.0] * dim  # unused in forward (only in pa_loss)
    # TODO(synk): pa_loss / x_loss / loss are scalar bookkeeping, not kernelized.

    key = jax.random.PRNGKey(0)
    k_mk, k_x = jax.random.split(key)
    mk = jax.random.normal(k_mk, (kk, dim), dtype=jnp.float32)   # Parameter ~ N(0,1)
    x = jax.random.normal(k_x, (2, 8, dim), dtype=jnp.float32)   # batch input -> N=16

    out = gmm_forward(x, mk)
    out = jax.block_until_ready(out)

    ref = gmm_forward_ref(x, mk)
    assert out.shape == (16, kk)
    assert jnp.allclose(out, ref, rtol=1e-5, atol=1e-6), "mismatch vs reference"

    print("KERNEL_OK")
</pallas_src>

<mosaic_0001>
module attributes {stable_mosaic.version = 11 : i64} {
  func.func @gmm_kernel(%arg0: i32, %arg1: memref<16x4xf32, #tpu.memory_space<vmem>>, %arg2: memref<4x128xf32, #tpu.memory_space<vmem>>, %arg3: memref<1x128xf32, #tpu.memory_space<vmem>>, %arg4: memref<16x128xf32, #tpu.memory_space<vmem>>) attributes {dimension_semantics = [#tpu.dimension_semantics<parallel>], iteration_bounds = array<i64: 2>, scalar_prefetch = 0 : i64, scratch_operands = 0 : i64, tpu.core_type = #tpu.core_type<tc>, window_params = [{transform_indices = @transform_0, window_bounds = array<i64: 16, 4>}, {pipeline_mode = #tpu.pipeline_mode<synchronous>, transform_indices = @transform_1, window_bounds = array<i64: 4, 128>}, {pipeline_mode = #tpu.pipeline_mode<synchronous>, transform_indices = @transform_2, window_bounds = array<i64: 1, 128>}, {transform_indices = @transform_3, window_bounds = array<i64: 16, 128>}]} {
    %c0 = arith.constant 0 : index
    %c0_0 = arith.constant 0 : index
    %0 = vector.load %arg1[%c0, %c0_0] : memref<16x4xf32, #tpu.memory_space<vmem>>, vector<16x4xf32>
    %c0_1 = arith.constant 0 : index
    %c0_2 = arith.constant 0 : index
    %1 = vector.load %arg2[%c0_1, %c0_2] : memref<4x128xf32, #tpu.memory_space<vmem>>, vector<4x128xf32>
    %cst = arith.constant dense<0.000000e+00> : vector<16x128xf32>
    %2 = tpu.matmul %0, %1, %cst {dimension_numbers = #tpu.dot_dimension_numbers<[1], [0], [0], [1], [0, 0, 1, 1], [], []>} : vector<16x4xf32>, vector<4x128xf32>, vector<16x128xf32> -> vector<16x128xf32>
    %3 = arith.mulf %0, %0 : vector<16x4xf32>
    %cst_3 = arith.constant dense<0.000000e+00> : vector<16xf32>
    %4 = vector.multi_reduction <add>, %3, %cst_3 [1] : vector<16x4xf32> to vector<16xf32>
    %5 = vector.shape_cast %4 : vector<16xf32> to vector<16x1xf32>
    %cst_4 = arith.constant 5.000000e-01 : f32
    %6 = vector.broadcast %cst_4 : f32 to vector<16x1xf32>
    %7 = arith.mulf %6, %5 : vector<16x1xf32>
    %8 = vector.broadcast %7 : vector<16x1xf32> to vector<16x128xf32>
    %9 = arith.subf %2, %8 : vector<16x128xf32>
    %c0_5 = arith.constant 0 : index
    %c0_6 = arith.constant 0 : index
    %10 = vector.load %arg3[%c0_5, %c0_6] : memref<1x128xf32, #tpu.memory_space<vmem>>, vector<1x128xf32>
    %11 = vector.broadcast %10 : vector<1x128xf32> to vector<16x128xf32>
    %12 = arith.addf %9, %11 : vector<16x128xf32>
    %13 = math.exp %12 : vector<16x128xf32>
    %c0_7 = arith.constant 0 : index
    %c0_8 = arith.constant 0 : index
    %14 = vector.load %arg4[%c0_7, %c0_8] : memref<16x128xf32, #tpu.memory_space<vmem>>, vector<16x128xf32>
    tpu.vector_store %arg4[%c0_7, %c0_8], %13 {strides = array<i32>} : memref<16x128xf32, #tpu.memory_space<vmem>>, vector<16x128xf32>,
    return
  }
  func.func @transform_0(%arg0: i32) -> (i32, i32) {
    %c0_i32 = arith.constant 0 : i32
    %c0_i32_0 = arith.constant 0 : i32
    return %arg0, %c0_i32 : i32, i32
  }
  func.func @transform_1(%arg0: i32) -> (i32, i32) {
    %c0_i32 = arith.constant 0 : i32
    %c0_i32_0 = arith.constant 0 : i32
    %c0_i32_1 = arith.constant 0 : i32
    return %c0_i32, %c0_i32_0 : i32, i32
  }
  func.func @transform_2(%arg0: i32) -> (i32, i32) {
    %c0_i32 = arith.constant 0 : i32
    %c0_i32_0 = arith.constant 0 : i32
    %c0_i32_1 = arith.constant 0 : i32
    return %c0_i32, %c0_i32_0 : i32, i32
  }
  func.func @transform_3(%arg0: i32) -> (i32, i32) {
    %c0_i32 = arith.constant 0 : i32
    %c0_i32_0 = arith.constant 0 : i32
    return %arg0, %c0_i32 : i32, i32
  }
}

</mosaic_0001>

<llo_original>
// kernel: tpu_custom_call.1
$region0: #{tpu_custom_call.1}
  #allocation0 [shape = 'u32[]', space=smem, size = 0x4, offset = 0x4, fixed_abs, tag = 'smem constant byte address 0x4 - core index']
  #allocation1 [shape = 'u32[72,128]{1,0:T(1,128)}', space=vmem, size = 0x9000, scoped, tag = 'internal scratch']
  %s0 = inlined_call_operand.vmem [shape: f32[32,4], index: 0, kind: input, shape index: {}]
  %s1 = inlined_call_operand.vmem [shape: f32[4,128], index: 1, kind: input, shape index: {}]
  %s2 = inlined_call_operand.vmem [shape: f32[1,128], index: 2, kind: input, shape index: {}]
  %s3 = inlined_call_operand.hbm [shape: f32[32,128], index: 3, kind: output, shape index: {}]
  %s4 = sld [smem:[#allocation0]]
  $region45: #{tpu_custom_call.1} parent=0
    _
  %s6 = ssub.s32 1, %s4
  %s7 = scalar_select 0, %s6, %s4
  $region1: #{tpu_custom_call.1} parent=0
    #allocation2 [shape = 'u8[16384]{0}', space=vmem, size = 0x4000, scoped, tag = 'output window, operand 0']
    #allocation3 [shape = 's32[2]{0}', space=sflag, size = 0x8, scoped, tag = 'scoped memory for tpu_custom_call.1']
    %8 = vsyncpa [#allocation3], 0
    %s9 = scalar_lea.sflag [#allocation3], 1
    %10 = vsyncpa %s9, 0
    loop: start=0, step=1, limit=4
    $region2: #{tpu_custom_call.1} parent=1 // loop_pre_header
      _
    $region3: #{tpu_custom_call.1} parent=1 // loop_header
      %s12 = sphi 0, %s16
      %p13 = scmp.ge.s32.totalorder %s12, 4
      %s22 = sphi 0, %s24
      %s25 = sphi 0, %s22
      %s26 = sphi 0, %s25
      %s42 = sphi 0, %s26
      %s46 = sphi 0, %s46
      %s48 = sphi 0, %s46
      %s49 = sphi 0, %s48
      %s63 = sphi 0, %s49
      %s67 = sphi 0, %s67
      %s69 = sphi 0, %s67
      %s70 = sphi 0, %s69
      %s84 = sphi 0, %s70
      %s90 = sphi 0, %s92
      %s93 = sphi 0, %s90
      %s94 = sphi 0, %s93
      %s110 = sphi 0, %s94
    $region4: #{tpu_custom_call.1} parent=1 // loop_header_branch
      %15 = sbr.rel (%p13) target = $region8
    $region5: #{tpu_custom_call.1} parent=1 // loop_body
      %s17 = ssub.s32 %s12, 1
      %s18 = ssub.s32 %s12, 2
      %s19 = sadd.s32 %s12, 1
      %s20 = ssub.s32 %s12, %s19
      %p21 = scmp.eq.s32.totalorder %s20, 0
      %s23 = sadd.s32 %s22, 1
      %s24 = scalar_select %p21, %s22, %s23
      %p27 = pneg %p21
      %p28 = scmp.eq.s32.totalorder %s12, 1
      %p29 = por %p27, %p28
      %p30 = scmp.ne.s32.totalorder %s22, %s25
      %p31 = scmp.eq.s32.totalorder %s12, 0
      %p32 = por %p30, %p31
      %p33 = scmp.ne.s32.totalorder %s22, %s25
      %p34 = scmp.eq.s32.totalorder %s17, 1
      %p35 = por %p33, %p34
      %p36 = scmp.ne.s32.totalorder %s25, %s26
      %p37 = scmp.eq.s32.totalorder %s17, 0
      %p38 = por %p36, %p37
      %p39 = scmp.ne.s32.totalorder %s25, %s26
      %p40 = scmp.eq.s32.totalorder %s18, 1
      %p41 = por %p39, %p40
      %p43 = scmp.ne.s32.totalorder %s26, %s42
      %p44 = scmp.eq.s32.totalorder %s18, 0
      %p45 = por %p43, %p44
      %s47 = sadd.s32 %s46, 1
      %p50 = scmp.eq.s32.totalorder %s12, 1
      %p51 = scmp.ne.s32.totalorder %s46, %s48
      %p52 = scmp.eq.s32.totalorder %s12, 0
      %p53 = por %p51, %p52
      %p54 = scmp.ne.s32.totalorder %s46, %s48
      %p55 = scmp.eq.s32.totalorder %s17, 1
      %p56 = por %p54, %p55
      %p57 = scmp.ne.s32.totalorder %s48, %s49
      %p58 = scmp.eq.s32.totalorder %s17, 0
      %p59 = por %p57, %p58
      %p60 = scmp.ne.s32.totalorder %s48, %s49
      %p61 = scmp.eq.s32.totalorder %s18, 1
      %p62 = por %p60, %p61
      %p64 = scmp.ne.s32.totalorder %s49, %s63
      %p65 = scmp.eq.s32.totalorder %s18, 0
      %p66 = por %p64, %p65
      %s68 = sadd.s32 %s67, 1
      %p71 = scmp.eq.s32.totalorder %s12, 1
      %p72 = scmp.ne.s32.totalorder %s67, %s69
      %p73 = scmp.eq.s32.totalorder %s12, 0
      %p74 = por %p72, %p73
      %p75 = scmp.ne.s32.totalorder %s67, %s69
      %p76 = scmp.eq.s32.totalorder %s17, 1
      %p77 = por %p75, %p76
      %p78 = scmp.ne.s32.totalorder %s69, %s70
      %p79 = scmp.eq.s32.totalorder %s17, 0
      %p80 = por %p78, %p79
      %p81 = scmp.ne.s32.totalorder %s69, %s70
      %p82 = scmp.eq.s32.totalorder %s18, 1
      %p83 = por %p81, %p82
      %p85 = scmp.ne.s32.totalorder %s70, %s84
      %p86 = scmp.eq.s32.totalorder %s18, 0
      %p87 = por %p85, %p86
      %s88 = ssub.s32 %s12, %s19
      %p89 = scmp.eq.s32.totalorder %s88, 0
      %s91 = sadd.s32 %s90, 1
      %s92 = scalar_select %p89, %s90, %s91
      %p95 = pneg %p89
      %p96 = scmp.eq.s32.totalorder %s12, 1
      %p97 = por %p95, %p96
      %p98 = scmp.ne.s32.totalorder %s90, %s93
      %p99 = scmp.eq.s32.totalorder %s12, 0
      %p100 = por %p98, %p99
      %p101 = scmp.ne.s32.totalorder %s90, %s93
      %p102 = scmp.eq.s32.totalorder %s17, 1
      %p103 = por %p101, %p102
      %p104 = scmp.ne.s32.totalorder %s93, %s94
      %p105 = scmp.eq.s32.totalorder %s17, 0
      %p106 = por %p104, %p105
      %p107 = scmp.ne.s32.totalorder %s93, %s94
      %p108 = scmp.eq.s32.totalorder %s18, 1
      %p109 = por %p107, %p108
      %p111 = scmp.ne.s32.totalorder %s94, %s110
      %p112 = scmp.eq.s32.totalorder %s18, 0
      %p113 = por %p111, %p112
      %p114 = scmp.le.s32.totalorder 1, %s12
      %p115 = scmp.lt.s32.totalorder %s12, 3
      %p116 = pnand %p114, %p115
      %p117 = pneg %p116
      // Predicated region
      $region9: #{tpu_custom_call.1} parent=5 // pred_check
        _
      $region10: #{tpu_custom_call.1} parent=5 // pred_check_branch
        %119 = sbr.rel (%p116) target = $region12
      $region11: #{tpu_custom_call.1} parent=5 // pred_region
        %s120 = ssub.s32 %s12, 1
        // Predicated region
        $region13: #{tpu_custom_call.1} parent=11 // pred_check
          %p121 = pneg %p59
        $region14: #{tpu_custom_call.1} parent=11 // pred_check_branch
          %123 = sbr.rel (%p121) target = $region16
        $region15: #{tpu_custom_call.1} parent=11 // pred_region
          _
        $region16: #{tpu_custom_call.1} parent=11 // pred_fallthru
          _
        // Predicated region
        $region17: #{tpu_custom_call.1} parent=11 // pred_check
          %p124 = pneg %p80
        $region18: #{tpu_custom_call.1} parent=11 // pred_check_branch
          %126 = sbr.rel (%p124) target = $region20
        $region19: #{tpu_custom_call.1} parent=11 // pred_region
          _
        $region20: #{tpu_custom_call.1} parent=11 // pred_fallthru
          _
      $region12: #{tpu_custom_call.1} parent=5 // pred_fallthru
        _
      %p127 = scmp.lt.s32.totalorder %s12, 2
      // Predicated region
      $region21: #{tpu_custom_call.1} parent=5 // pred_check
        %p128 = pneg %p127
      $region22: #{tpu_custom_call.1} parent=5 // pred_check_branch
        %130 = sbr.rel (%p128) target = $region24
      $region23: #{tpu_custom_call.1} parent=5 // pred_region
        // Predicated region
        $region25: #{tpu_custom_call.1} parent=23 // pred_check
          %p131 = pneg %p32
        $region26: #{tpu_custom_call.1} parent=23 // pred_check_branch
          %133 = sbr.rel (%p131) target = $region28
        $region27: #{tpu_custom_call.1} parent=23 // pred_region
          %s134 = smul.u32 2, %s12
          %p135 = scmp.lt.s32.totalorder %s134, 3
          %s136 = scalar_select %p135, %s134, 3
          %s137 = smul.addr %s136, 8
          %s138 = scalar_lea.vmem %s0, %s137
          %s139 = smul.u32 2, %s12
        $region28: #{tpu_custom_call.1} parent=23 // pred_fallthru
          _
      $region24: #{tpu_custom_call.1} parent=5 // pred_fallthru
        _
      %p140 = scmp.le.s32.totalorder 1, %s12
      %p141 = scmp.lt.s32.totalorder %s12, 3
      %p142 = pnand %p140, %p141
      %p143 = pneg %p142
      // Predicated region
      $region29: #{tpu_custom_call.1} parent=5 // pred_check
        _
      $region30: #{tpu_custom_call.1} parent=5 // pred_check_branch
        %145 = sbr.rel (%p142) target = $region32
      $region31: #{tpu_custom_call.1} parent=5 // pred_region
        %s146 = ssub.s32 %s12, 1
        %s147 = smul.u32 2, %s17
        %p148 = scmp.lt.s32.totalorder %s147, 3
        %s149 = scalar_select %p148, %s147, 3
        %s150 = smul.addr %s149, 8
        %s151 = scalar_lea.vmem %s0, %s150
        %p152 = pneg %p38
        %p153 = pneg %p35
        %p154 = pneg %p59
        %p155 = pneg %p56
        %p156 = pneg %p80
        %p157 = pneg %p77
        %p158 = pneg %p106
        %p159 = pneg %p103
        %s160 = sand.u32 %s93, 1
        %s161 = scalar_lea.sflag [#allocation3], %s160
        %s162 = sand.u32 %s93, 1
        %s163 = smul.addr %s162, 16
        %s164 = scalar_lea.vmem [#allocation2], %s163
        %s165 = smul.u32 2, %s17
        %p166 = scmp.lt.s32.totalorder %s165, 3
        %s167 = scalar_select %p166, %s165, 3
        %s168 = smul.addr %s167, 8
        %s169 = scalar_lea.vmem %s0, %s168
        %s170 = smul.u32 2, %s17
        %s171 = smul.u32 2, %s17
        %v172 = vld [vmem:[%s169] sm:$0xff]
        %v173 = vld [vmem:[%s169 + $0x8] sm:$0xff]
        %v174 = vld [vmem:[%s1] sm:$0xf]
        %vm175 = vcmask 31744
        %v177 = vsel %vm175, %v172, 0
        %v180 = vsel %vm175, %v173, 0
        %vm182 = vcmask 1043456
        %v184 = vsel %vm182, %v174, 0
        %186 = vmatpush.msra.mxu0 0.0
        %187 = vmatpush.msra.mxu0 0.0
        %188 = vmatpush.msra.mxu0 0.0
        %189 = vmatpush.msra.mxu0 0.0
        %190 = vmatpush.msra.mxu0 0.0
        %191 = vmatpush.msra.mxu0 0.0
        %192 = vmatpush.msra.mxu0 0.0
        %193 = vmatpush.msra.mxu0 0.0
        %194 = vmatpush.msra.mxu0 0.0
        %195 = vmatpush.msra.mxu0 0.0
        %196 = vmatpush.msra.mxu0 0.0
        %197 = vmatpush.msra.mxu0 0.0
        %198 = vmatpush.msra.mxu0 0.0
        %199 = vmatpush.msra.mxu0 0.0
        %200 = vmatpush.msra.mxu0 0.0
        %201 = vmatpush.msra.mxu0 %v184
        %202 = vmatmul.f32.gmra.mxu0 %v177
        %v203 = vpop.f32.mrf.mxu0
        %v204 = vadd.f32 0.0, %v203
        %205 = vmatmul.f32.gmra.mxu0 %v180
        %v206 = vpop.f32.mrf.mxu0
        %v207 = vadd.f32 0.0, %v206
        %208 = vdwg.mxu0
        %v209 = vmul.f32 %v172, %v172
        %v210 = vmul.f32 %v173, %v173
        %v211 = vsel %vm175, %v209, 0.0
        %212 = vadd.xlane.f32.xlu0 %v211
        %v213 = vpop.xlane.xlu0 %212
        %v214 = vsel %vm175, %v210, 0.0
        %215 = vadd.xlane.f32.xlu0 %v214
        %v216 = vpop.xlane.xlu0 %215
        %v217 = vmul.f32 %v213, 0.5
        %v218 = vmul.f32 %v216, 0.5
        %v219 = vsub.f32 %v204, %v217
        %v220 = vsub.f32 %v207, %v218
        %v221 = vld [vmem:[%s2] sm:$0x1]
        %v223 = vperm.slane %v221, 0
        %v225 = vadd.f32 %v219, %v223
        %v226 = vadd.f32 %v220, %v223
        %v227 = vmul.f32 %v225, 1.442695
        %v228 = vpow.pop %v227
        %v229 = vmul.f32 %v226, 1.442695
        %v230 = vpow.pop %v229
        %231 = vst [vmem:[%s164] sm:$0xff] %v228
        %232 = vst [vmem:[%s164 + $0x8] sm:$0xff] %v230
        %s233 = sand.u32 %s93, 1
        %s234 = scalar_lea.sflag [#allocation3], %s233
        %s235 = sand.u32 %s93, 1
        %s236 = smul.addr %s235, 16
        %s237 = scalar_lea.vmem [#allocation2], %s236
        // Predicated region
        $region33: #{tpu_custom_call.1} parent=31 // pred_check
          %p238 = pneg %p103
        $region34: #{tpu_custom_call.1} parent=31 // pred_check_branch
          %240 = sbr.rel (%p238) target = $region36
        $region35: #{tpu_custom_call.1} parent=31 // pred_region
          %s241 = smul.u32 2, %s17
          %243 = vsyncadd %s234, 0
          %s244 = smul.addr %s241, 8
          %s245 = scalar_lea.hbm %s3, %s244
          %s246 = sshll.u32 %s237, 4
          %s247 = int_to_ptr.vmem [resolvable:$true] %s246
          %s248 = sshll.u32 %s245, 4
          %s249 = int_to_ptr.hbm [resolvable:$true] %s248
          %254 = dma.vmem_to_hbm [thread:$0]  %s247, 256, %s249, %s234, 128, 128, 8
        $region36: #{tpu_custom_call.1} parent=31 // pred_fallthru
          _
      $region32: #{tpu_custom_call.1} parent=5 // pred_fallthru
        _
      %p255 = scmp.le.s32.totalorder 2, %s12
      // Predicated region
      $region37: #{tpu_custom_call.1} parent=5 // pred_check
        %p256 = pneg %p255
      $region38: #{tpu_custom_call.1} parent=5 // pred_check_branch
        %258 = sbr.rel (%p256) target = $region40
      $region39: #{tpu_custom_call.1} parent=5 // pred_region
        %s259 = ssub.s32 %s12, 2
        // Predicated region
        $region41: #{tpu_custom_call.1} parent=39 // pred_check
          %p260 = pneg %p109
        $region42: #{tpu_custom_call.1} parent=39 // pred_check_branch
          %262 = sbr.rel (%p260) target = $region44
        $region43: #{tpu_custom_call.1} parent=39 // pred_region
          %s263 = sand.u32 %s94, 1
          %s264 = scalar_lea.sflag [#allocation3], %s263
          %s265 = sand.u32 %s94, 1
          %s266 = smul.addr %s265, 16
          %s267 = scalar_lea.vmem [#allocation2], %s266
          %269 = dma.done %s264, 256
        $region44: #{tpu_custom_call.1} parent=39 // pred_fallthru
          _
      $region40: #{tpu_custom_call.1} parent=5 // pred_fallthru
        _
    $region6: #{tpu_custom_call.1} parent=1 // loop_footer
      %s16 = sadd.s32 1, %s12
    $region7: #{tpu_custom_call.1} parent=1 // loop_footer_branch
      %11 = sbr.rel target = $region3
    $region8: #{tpu_custom_call.1} parent=1 // loop_exit
      _
    %270 = vsyncpa [#allocation3], 1
    %s271 = scalar_lea.sflag [#allocation3], 1
    %272 = vsyncpa %s271, 1

</llo_original>
